<compile_context>
chip_gen: v7x
topology: tpu7x:2x2x1
jax: 0.10.0
libtpu: 0.0.40
codegen_flags: <defaults>
</compile_context>

<pallas_src>
import jax
import jax.numpy as jnp
from jax import lax
from jax.experimental import pallas as pl
from jax.experimental.pallas import tpu as pltpu


def _cdiv(a, b):
    return -(-a // b)


def _round_up(x, m):
    return ((x + m - 1) // m) * m


def _sublane(dtype):
    # Dtype-native sublane packing: 8 rows for 4-byte, 16 for 2-byte, 32 for 1-byte.
    return max(8, 32 // jnp.dtype(dtype).itemsize)


def _vmem_params():
    """(tile budget bytes, vmem_limit_bytes), generation-gated."""
    cap = None
    try:
        info = pltpu.get_tpu_info()
        cap = getattr(info, "vmem_capacity_bytes", None)
    except Exception:
        cap = None
    if cap is None:
        cap = 64 * 1024 * 1024          # assume the smallest (v7x-sized) VMEM
    if cap >= 128 * 1024 * 1024:        # v5e / v6e: 128 MiB physical VMEM
        return 44 * 1024 * 1024, 64 * 1024 * 1024
    return 20 * 1024 * 1024, 32 * 1024 * 1024   # v7x (64 MiB) or unknown


def _make_soft_dice_kernel(r, sub, groups, b_tile, rows, needs_mask):
    """Kernel for one (b_tile, r, 128) tile pair.

    Per grid step and per batch row it emits two (sub, 128) f32 partial-sum
    blocks: sum(m1 + m2) and sum(m1 * m2), kept vreg-resident while streaming.
    """
    n_groups = r // sub            # (sub, 128)-row groups in this tile
    n_iters = n_groups // groups   # fori_loop iterations (groups per iter)
    rem = n_groups % groups        # statically unrolled tail groups (< groups)
    chunk = groups * sub

    def kernel(m1_ref, m2_ref, o_ref):
        # m1_ref / m2_ref: (b_tile, r, 128) tiles in their native dtype.
        # o_ref:           (b_tile, 1, 2*sub, 128) f32 partial sums.
        t = pl.program_id(1)
        if needs_mask:
            valid = rows - t * r   # valid rows in this tile (>= r except last)
            iota = lax.broadcasted_iota(jnp.int32, (sub, 128), 0)

        def accum(bi, off, s12, si):
            a = m1_ref[bi, pl.ds(off, sub), :].astype(jnp.float32)
            b = m2_ref[bi, pl.ds(off, sub), :].astype(jnp.float32)
            if needs_mask:
                keep = (iota + off) < valid
                a = jnp.where(keep, a, jnp.float32(0.0))
                b = jnp.where(keep, b, jnp.float32(0.0))
            return s12 + (a + b), si + a * b

        zero = jnp.zeros((sub, 128), jnp.float32)
        for bi in range(b_tile):
            s12, si = zero, zero
            if n_iters > 0:
                def body(i, carry, bi=bi):
                    s12, si = carry
                    base = pl.multiple_of(i * chunk, chunk)
                    for g in range(groups):
                        s12, si = accum(bi, base + g * sub, s12, si)
                    return s12, si

                s12, si = lax.fori_loop(0, n_iters, body, (s12, si))
            for g in range(rem):
                s12, si = accum(bi, n_iters * chunk + g * sub, s12, si)
            o_ref[bi, 0, pl.ds(0, sub), :] = s12
            o_ref[bi, 0, pl.ds(sub, sub), :] = si

    return kernel


@jax.jit
def soft_dice_loss(logits, targets):
    """Pallas implementation of SoftDiceLoss.forward (returns scalar f32)."""
    bs = targets.shape[0]
    m1 = logits.reshape(bs, -1)            # keep native dtype (no wrapper cast)
    m2 = targets.reshape(bs, -1)
    n = m1.shape[1]

    i1 = m1.dtype.itemsize
    i2 = m2.dtype.itemsize
    sub = max(_sublane(m1.dtype), _sublane(m2.dtype))
    groups = 8                              # sublane-groups per fori iteration

    # --- lane-dense layout: free reshape when n % 128 == 0 -----------------
    n_pad = _round_up(n, 128)
    if n_pad != n:
        # TODO(synk): lane-ragged tails (n % 128 != 0) still cost one padded
        # copy of the inputs; handle fully in-kernel with a lane mask if this
        # path ever matters.
        m1 = jnp.pad(m1, ((0, 0), (0, n_pad - n)))
        m2 = jnp.pad(m2, ((0, 0), (0, n_pad - n)))
    rows = n_pad // 128
    m1r = m1.reshape(bs, rows, 128)
    m2r = m2.reshape(bs, rows, 128)

    # --- tile sizing: only the double-buffered input tiles cost VMEM -------
    budget, vmem_limit = _vmem_params()
    per_row_bytes = 2 * 128 * (i1 + i2)                 # 2 pipeline buffers/input
    r_cap = max(sub, min(65536, (budget // per_row_bytes) // sub * sub))
    tiles0 = _cdiv(rows, r_cap)
    r = _round_up(_cdiv(rows, tiles0), sub)             # <= r_cap
    tiles = _cdiv(rows, r)                              # only last tile partial
    needs_mask = (tiles * r != rows)                    # static

    # Small-input path: one grid step covering several batch rows.
    b_tile = 1
    if tiles == 1 and 2 <= bs <= 8 and bs * r * 128 * (i1 + i2) * 2 <= budget:
        b_tile = bs

    kernel = _make_soft_dice_kernel(
        r=r, sub=sub, groups=groups, b_tile=b_tile, rows=rows,
        needs_mask=needs_mask)

    parts = pl.pallas_call(
        kernel,
        out_shape=jax.ShapeDtypeStruct((bs, tiles, 2 * sub, 128), jnp.float32),
        grid_spec=pltpu.PrefetchScalarGridSpec(
            num_scalar_prefetch=0,
            grid=(bs // b_tile, tiles),
            in_specs=[
                pl.BlockSpec((b_tile, r, 128), lambda b, t: (b, t, 0)),
                pl.BlockSpec((b_tile, r, 128), lambda b, t: (b, t, 0)),
            ],
            out_specs=pl.BlockSpec((b_tile, 1, 2 * sub, 128),
                                   lambda b, t: (b, t, 0, 0)),
        ),
        compiler_params=pltpu.CompilerParams(
            # No cross-step accumulation -> both axes parallel (v7x megacore
            # can split the feature-tile axis even when bs < 2).
            dimension_semantics=("parallel", "parallel"),
            vmem_limit_bytes=vmem_limit,
        ),
        cost_estimate=pl.CostEstimate(
            flops=4 * bs * n,
            transcendentals=0,
            bytes_accessed=bs * rows * 128 * (i1 + i2)
            + bs * tiles * 2 * sub * 128 * 4,
        ),
    )(m1r, m2r)

    # Tiny epilogue in XLA: reduce partial sums, compute dice score, batch mean.
    parts = parts.reshape(bs, tiles, 2, sub, 128)
    sums = jnp.sum(parts, axis=(1, 3, 4))      # (bs, 2): [s1+s2, intersection]
    s12 = sums[:, 0]
    si = sums[:, 1]
    smooth = jnp.float32(1e-05)
    score = (si + smooth) / (s12 - si + smooth)
    return jnp.sum(score) / jnp.float32(bs)


def soft_dice_loss_ref(logits, targets):
    """Pure-JAX reference matching the PyTorch module semantics."""
    bs = targets.shape[0]
    smooth = 1e-05
    m1 = logits.reshape(bs, -1).astype(jnp.float32)
    m2 = targets.reshape(bs, -1).astype(jnp.float32)
    inter = m1 * m2
    score = (inter.sum(1) + smooth) / (
        m1.sum(1) + m2.sum(1) - inter.sum(1) + smooth
    )
    return score.sum() / bs


if __name__ == "__main__":
    key = jax.random.PRNGKey(0)
    k1, k2 = jax.random.split(key)

    # Small NCHW shapes: batch=2, channels=4, spatial=16x16.
    logits = jax.nn.sigmoid(
        jax.random.normal(k1, (2, 4, 16, 16), dtype=jnp.float32)
    )
    targets = jax.random.bernoulli(k2, 0.5, (2, 4, 16, 16)).astype(jnp.float32)

    out = soft_dice_loss(logits, targets)
    jax.block_until_ready(out)

    ref = soft_dice_loss_ref(logits, targets)
    assert jnp.allclose(out, ref, rtol=1e-5, atol=1e-6), (out, ref)

    print("KERNEL_OK")
</pallas_src>

<mosaic_0001>
module attributes {stable_mosaic.version = 11 : i64} {
  func.func @kernel(%arg0: i32, %arg1: i32, %arg2: memref<2x8x128xf32, #tpu.memory_space<vmem>>, %arg3: memref<2x8x128xf32, #tpu.memory_space<vmem>>, %arg4: memref<2x1x16x128xf32, #tpu.memory_space<vmem>>) attributes {dimension_semantics = [#tpu.dimension_semantics<parallel>, #tpu.dimension_semantics<parallel>], iteration_bounds = array<i64: 1, 1>, scalar_prefetch = 0 : i64, scratch_operands = 0 : i64, tpu.core_type = #tpu.core_type<tc>, window_params = [{transform_indices = @transform_0, window_bounds = array<i64: 2, 8, 128>}, {transform_indices = @transform_1, window_bounds = array<i64: 2, 8, 128>}, {transform_indices = @transform_2, window_bounds = array<i64: 2, 1, 16, 128>}]} {
    %cst = arith.constant 0.000000e+00 : f32
    %0 = vector.broadcast %cst : f32 to vector<8x128xf32>
    %c0 = arith.constant 0 : index
    %c0_0 = arith.constant 0 : index
    %c0_1 = arith.constant 0 : index
    %1 = vector.load %arg2[%c0, %c0_0, %c0_1] : memref<2x8x128xf32, #tpu.memory_space<vmem>>, vector<1x8x128xf32>
    %2 = vector.shape_cast %1 : vector<1x8x128xf32> to vector<8x128xf32>
    %c0_2 = arith.constant 0 : index
    %c0_3 = arith.constant 0 : index
    %c0_4 = arith.constant 0 : index
    %3 = vector.load %arg3[%c0_2, %c0_3, %c0_4] : memref<2x8x128xf32, #tpu.memory_space<vmem>>, vector<1x8x128xf32>
    %4 = vector.shape_cast %3 : vector<1x8x128xf32> to vector<8x128xf32>
    %5 = arith.addf %2, %4 : vector<8x128xf32>
    %6 = arith.addf %0, %5 : vector<8x128xf32>
    %7 = arith.mulf %2, %4 : vector<8x128xf32>
    %8 = arith.addf %0, %7 : vector<8x128xf32>
    %c0_5 = arith.constant 0 : index
    %c0_6 = arith.constant 0 : index
    %c0_7 = arith.constant 0 : index
    %c0_8 = arith.constant 0 : index
    %9 = vector.load %arg4[%c0_5, %c0_6, %c0_7, %c0_8] : memref<2x1x16x128xf32, #tpu.memory_space<vmem>>, vector<1x1x8x128xf32>
    %10 = vector.shape_cast %9 : vector<1x1x8x128xf32> to vector<8x128xf32>
    %11 = vector.shape_cast %6 : vector<8x128xf32> to vector<1x1x8x128xf32>
    tpu.vector_store %arg4[%c0_5, %c0_6, %c0_7, %c0_8], %11 {strides = array<i32>} : memref<2x1x16x128xf32, #tpu.memory_space<vmem>>, vector<1x1x8x128xf32>,
    %c0_9 = arith.constant 0 : index
    %c0_10 = arith.constant 0 : index
    %c8 = arith.constant 8 : index
    %c0_11 = arith.constant 0 : index
    %12 = vector.load %arg4[%c0_9, %c0_10, %c8, %c0_11] : memref<2x1x16x128xf32, #tpu.memory_space<vmem>>, vector<1x1x8x128xf32>
    %13 = vector.shape_cast %12 : vector<1x1x8x128xf32> to vector<8x128xf32>
    %14 = vector.shape_cast %8 : vector<8x128xf32> to vector<1x1x8x128xf32>
    tpu.vector_store %arg4[%c0_9, %c0_10, %c8, %c0_11], %14 {strides = array<i32>} : memref<2x1x16x128xf32, #tpu.memory_space<vmem>>, vector<1x1x8x128xf32>,
    %c1 = arith.constant 1 : index
    %c0_12 = arith.constant 0 : index
    %c0_13 = arith.constant 0 : index
    %15 = vector.load %arg2[%c1, %c0_12, %c0_13] : memref<2x8x128xf32, #tpu.memory_space<vmem>>, vector<1x8x128xf32>
    %16 = vector.shape_cast %15 : vector<1x8x128xf32> to vector<8x128xf32>
    %c1_14 = arith.constant 1 : index
    %c0_15 = arith.constant 0 : index
    %c0_16 = arith.constant 0 : index
    %17 = vector.load %arg3[%c1_14, %c0_15, %c0_16] : memref<2x8x128xf32, #tpu.memory_space<vmem>>, vector<1x8x128xf32>
    %18 = vector.shape_cast %17 : vector<1x8x128xf32> to vector<8x128xf32>
    %19 = arith.addf %16, %18 : vector<8x128xf32>
    %20 = arith.addf %0, %19 : vector<8x128xf32>
    %21 = arith.mulf %16, %18 : vector<8x128xf32>
    %22 = arith.addf %0, %21 : vector<8x128xf32>
    %c1_17 = arith.constant 1 : index
    %c0_18 = arith.constant 0 : index
    %c0_19 = arith.constant 0 : index
    %c0_20 = arith.constant 0 : index
    %23 = vector.load %arg4[%c1_17, %c0_18, %c0_19, %c0_20] : memref<2x1x16x128xf32, #tpu.memory_space<vmem>>, vector<1x1x8x128xf32>
    %24 = vector.shape_cast %23 : vector<1x1x8x128xf32> to vector<8x128xf32>
    %25 = vector.shape_cast %20 : vector<8x128xf32> to vector<1x1x8x128xf32>
    tpu.vector_store %arg4[%c1_17, %c0_18, %c0_19, %c0_20], %25 {strides = array<i32>} : memref<2x1x16x128xf32, #tpu.memory_space<vmem>>, vector<1x1x8x128xf32>,
    %c1_21 = arith.constant 1 : index
    %c0_22 = arith.constant 0 : index
    %c8_23 = arith.constant 8 : index
    %c0_24 = arith.constant 0 : index
    %26 = vector.load %arg4[%c1_21, %c0_22, %c8_23, %c0_24] : memref<2x1x16x128xf32, #tpu.memory_space<vmem>>, vector<1x1x8x128xf32>
    %27 = vector.shape_cast %26 : vector<1x1x8x128xf32> to vector<8x128xf32>
    %28 = vector.shape_cast %22 : vector<8x128xf32> to vector<1x1x8x128xf32>
    tpu.vector_store %arg4[%c1_21, %c0_22, %c8_23, %c0_24], %28 {strides = array<i32>} : memref<2x1x16x128xf32, #tpu.memory_space<vmem>>, vector<1x1x8x128xf32>,
    return
  }
  func.func @transform_0(%arg0: i32, %arg1: i32) -> (i32, i32, i32) {
    %c0_i32 = arith.constant 0 : i32
    %c0_i32_0 = arith.constant 0 : i32
    return %arg0, %arg1, %c0_i32 : i32, i32, i32
  }
  func.func @transform_1(%arg0: i32, %arg1: i32) -> (i32, i32, i32) {
    %c0_i32 = arith.constant 0 : i32
    %c0_i32_0 = arith.constant 0 : i32
    return %arg0, %arg1, %c0_i32 : i32, i32, i32
  }
  func.func @transform_2(%arg0: i32, %arg1: i32) -> (i32, i32, i32, i32) {
    %c0_i32 = arith.constant 0 : i32
    %c0_i32_0 = arith.constant 0 : i32
    %c0_i32_1 = arith.constant 0 : i32
    return %arg0, %arg1, %c0_i32, %c0_i32_0 : i32, i32, i32, i32
  }
}

</mosaic_0001>

<llo_original>
// kernel: soft_dice_loss.1
$region0: #{soft_dice_loss.1}
  #allocation0 [shape = 'u32[]', space=smem, size = 0x4, offset = 0x4, fixed_abs, tag = 'smem constant byte address 0x4 - core index']
  #allocation1 [shape = 'u32[144,128]{1,0:T(1,128)}', space=vmem, size = 0x12000, scoped, tag = 'internal scratch']
  %s0 = inlined_call_operand.vmem [shape: f32[2,8,128], index: 0, kind: input, shape index: {}]
  %s1 = inlined_call_operand.vmem [shape: f32[2,8,128], index: 1, kind: input, shape index: {}]
  %s2 = inlined_call_operand.vmem [shape: f32[2,1,16,128], index: 2, kind: output, shape index: {}]
  %s3 = sld [smem:[#allocation0]]
  $region18: #{soft_dice_loss.1} parent=0
    _
  %s5 = ssub.s32 1, %s3
  %s6 = scalar_select 0, %s5, %s3
  // Predicated region
  $region2: #{soft_dice_loss.1} parent=0 // pred_check
    _
  $region3: #{soft_dice_loss.1} parent=0 // pred_check_branch
    %8 = sbr.rel (0) target = $region5
  $region4: #{soft_dice_loss.1} parent=0 // pred_region
    _
  $region5: #{soft_dice_loss.1} parent=0 // pred_fallthru
    _
  // Predicated region
  $region6: #{soft_dice_loss.1} parent=0 // pred_check
    _
  $region7: #{soft_dice_loss.1} parent=0 // pred_check_branch
    %10 = sbr.rel (0) target = $region9
  $region8: #{soft_dice_loss.1} parent=0 // pred_region
    _
  $region9: #{soft_dice_loss.1} parent=0 // pred_fallthru
    _
  %v11 = vld [vmem:[%s0] sm:$0xff]
  %v12 = vld [vmem:[%s1] sm:$0xff]
  %v13 = vadd.f32 %v11, %v12
  %v14 = vadd.f32 %v13, 0.0
  %v15 = vmul.f32 %v11, %v12
  %v16 = vadd.f32 %v15, 0.0
  %17 = vst [vmem:[%s2] sm:$0xff] %v14
  %18 = vst [vmem:[%s2 + $0x8] sm:$0xff] %v16
  %s19 = scalar_lea.vmem %s0, 8
  %v20 = vld [vmem:[%s19] sm:$0xff]
  %s21 = scalar_lea.vmem %s1, 8
  %v22 = vld [vmem:[%s21] sm:$0xff]
  %v23 = vadd.f32 %v20, %v22
  %v24 = vadd.f32 %v23, 0.0
  %v25 = vmul.f32 %v20, %v22
  %v26 = vadd.f32 %v25, 0.0
  %s27 = scalar_lea.vmem %s2, 16
  %28 = vst [vmem:[%s27] sm:$0xff] %v24
  %29 = vst [vmem:[%s27 + $0x8] sm:$0xff] %v26
  // Predicated region
  $region10: #{soft_dice_loss.1} parent=0 // pred_check
    _
  $region11: #{soft_dice_loss.1} parent=0 // pred_check_branch
    %31 = sbr.rel (0) target = $region13
  $region12: #{soft_dice_loss.1} parent=0 // pred_region
    _
  $region13: #{soft_dice_loss.1} parent=0 // pred_fallthru
    _
  // Predicated region
  $region14: #{soft_dice_loss.1} parent=0 // pred_check
    _
  $region15: #{soft_dice_loss.1} parent=0 // pred_check_branch
    %33 = sbr.rel (0) target = $region17
  $region16: #{soft_dice_loss.1} parent=0 // pred_region
    _
  $region17: #{soft_dice_loss.1} parent=0 // pred_fallthru
    _

</llo_original>
